<compile_context>
chip_gen: v7x
topology: tpu7x:2x2x1
jax: 0.10.0
libtpu: 0.0.40
codegen_flags: <defaults>
</compile_context>

<pallas_src>
import functools

import jax
import jax.numpy as jnp
from jax import lax
from jax.experimental import pallas as pl
from jax.experimental.pallas import tpu as pltpu


def _choose_tile(hw_in, hw_out):
    """Pick a lane-dense output tile (multiple of 128) that fits VMEM."""
    budget = 40 * 1024 * 1024  # keep headroom under the 48 MiB limit (v7x-safe)
    # Dominant per-output-lane cost: f32 scatter accumulator + f32 outer-product
    # temp + bf16 copy, plus slack for flow/out tiles and temporaries.
    per_lane = hw_in * (4 + 4 + 2) + 4096
    tn = max(128, min(2048, (budget // per_lane) // 128 * 128))
    tn = min(tn, max(128, pl.cdiv(hw_out, 128) * 128))
    return int(tn)


def _resample2d_kernel(x_ref, f_ref, o_ref, *, src_h, src_w, out_w,
                       kernel_size, dilation, neg_inv_two_sigma2, tile_n):
    """Per-(batch, output-tile) kernel.

    x_ref: (1, D, src_h*src_w)  source features (flattened spatial), resident
    f_ref: (1, 2, tile_n)       [flow_x, flow_y] for this output tile
    o_ref: (1, D, tile_n)       warped output tile
    """
    hw_in = src_h * src_w
    j = pl.program_id(1)

    flow = f_ref[0].astype(jnp.float32)          # (2, TN)
    flow_x = flow[0:1, :]                        # (1, TN)
    flow_y = flow[1:2, :]

    # Flattened output pixel index for this tile. Decode (y, x) in f32: exact
    # for hw_out < 2^24 (no flattened *source* index is ever formed, so the
    # int-exactness hazard flagged in review does not apply to the gather).
    p = j * tile_n + lax.broadcasted_iota(jnp.int32, (1, tile_n), 1)
    p_f = p.astype(jnp.float32)
    y_base = jnp.floor(p_f / float(out_w))
    x_base = p_f - y_base * float(out_w)

    xf = x_base + flow_x
    yf = y_base + flow_y
    x0 = jnp.floor(xf)
    y0 = jnp.floor(yf)

    # Per-tap Gaussian weights (f32; exp -> EUP). Weights use the *unclamped*
    # tap positions, indices use the clamped ones (matches reference).
    k = kernel_size
    ws = []
    wsum = jnp.zeros((1, tile_n), jnp.float32)
    for fy in range(k):
        dy = y0 + float(fy * dilation) - yf
        for fx in range(k):
            dx = x0 + float(fx * dilation) - xf
            w = jnp.exp((dx * dx + dy * dy) * neg_inv_two_sigma2)
            ws.append(w)
            wsum = wsum + w
    inv_wsum = pl.reciprocal(wsum, approx=True)   # EUP slot, ~free

    # Clamped integer tap coordinates, separable in y (per fy) and x (per fx).
    yi = [jnp.clip(y0 + float(fy * dilation), 0.0, float(src_h - 1))
          .astype(jnp.int32) for fy in range(k)]             # each (1, TN)
    xi = [jnp.clip(x0 + float(fx * dilation), 0.0, float(src_w - 1))
          .astype(jnp.int32) for fx in range(k)]             # each (1, TN)

    # Separable build of the (src_h, src_w, TN) scatter tensor:
    #   ST[h, w, p] = sum_fy onehot_h(yi_fy) * ( sum_fx wn_{fy,fx} * onehot_w(xi_fx) )
    # Small 2D one-hots + k outer products instead of k^2 full-size compares.
    row_iota = lax.broadcasted_iota(jnp.int32, (src_h, tile_n), 0)
    col_iota = lax.broadcasted_iota(jnp.int32, (src_w, tile_n), 0)
    col_onehot = [(col_iota == xi[fx]).astype(jnp.float32) for fx in range(k)]

    st = jnp.zeros((src_h, src_w, tile_n), jnp.float32)
    for fy in range(k):
        row_oh = (row_iota == yi[fy]).astype(jnp.float32)     # (src_h, TN)
        cw = jnp.zeros((src_w, tile_n), jnp.float32)
        for fx in range(k):
            wn = ws[fy * k + fx] * inv_wsum                   # (1, TN)
            cw = cw + wn * col_onehot[fx]                     # (src_w, TN)
        st = st + row_oh[:, None, :] * cw[None, :, :]         # (src_h, src_w, TN)

    # MXU gather-matmul in bf16 with f32 accumulation.
    st2 = st.reshape(hw_in, tile_n).astype(jnp.bfloat16)      # (hw_in, TN)
    x = x_ref[0].astype(jnp.bfloat16)                         # (D, hw_in)
    out = jnp.dot(x, st2, preferred_element_type=jnp.float32)  # (D, TN)
    o_ref[0] = out.astype(o_ref.dtype)


def resample2d(input1, input2, kernel_size=2, dilation=1, sigma=5.0,
               tile_n=None):
    """Forward pass of the Resample2d module (NCHW in / NCHW out)."""
    B, D, Hs, Ws = input1.shape
    B2, two, H, W = input2.shape
    assert B2 == B and two == 2
    assert float(sigma) > 0.0, "sigma must be > 0"

    hw_in = Hs * Ws
    hw_out = H * W

    if tile_n is None:
        tile_n = _choose_tile(hw_in, hw_out)
    tile_n = int(tile_n)
    assert tile_n % 128 == 0, "tile_n must be a multiple of 128 (lane-dense)"

    hw_out_p = int(pl.cdiv(hw_out, tile_n)) * tile_n
    n_tiles = hw_out_p // tile_n

    x_flat = input1.reshape(B, D, hw_in)
    f_flat = input2.reshape(B, 2, hw_out)
    if hw_out_p != hw_out:
        # Pad the flow with zeros; padded lanes compute harmless clamped
        # samples that are sliced off below.
        f_flat = jnp.pad(f_flat, ((0, 0), (0, 0), (0, hw_out_p - hw_out)))

    kern = functools.partial(
        _resample2d_kernel,
        src_h=Hs, src_w=Ws, out_w=W,
        kernel_size=kernel_size, dilation=dilation,
        neg_inv_two_sigma2=-1.0 / (2.0 * float(sigma) * float(sigma)),
        tile_n=tile_n)

    out_flat = pl.pallas_call(
        kern,
        out_shape=jax.ShapeDtypeStruct((B, D, hw_out_p), input1.dtype),
        grid_spec=pltpu.PrefetchScalarGridSpec(
            num_scalar_prefetch=0,
            grid=(B, n_tiles),
            in_specs=[
                # Source block stays resident across the tile axis.
                pl.BlockSpec((1, D, hw_in), lambda b, j: (b, 0, 0)),
                # Flow tiles stream.
                pl.BlockSpec((1, 2, tile_n), lambda b, j: (b, 0, j)),
            ],
            out_specs=pl.BlockSpec((1, D, tile_n), lambda b, j: (b, 0, j)),
        ),
        compiler_params=pltpu.CompilerParams(
            dimension_semantics=("parallel", "parallel"),
            vmem_limit_bytes=48 * 1024 * 1024),
    )(x_flat, f_flat)

    return out_flat[:, :, :hw_out].reshape(B, D, H, W)


def _reference(input1, input2, kernel_size, dilation, sigma):
    """Pure-JAX f32 reference of the same semantics (for correctness check)."""
    B, D, Hs, Ws = input1.shape
    _, _, H, W = input2.shape
    sig = jnp.full((B, H, W), sigma, jnp.float32)
    xs_g = jnp.arange(W, dtype=jnp.float32)[None, None, :]
    ys_g = jnp.arange(H, dtype=jnp.float32)[None, :, None]
    xf = xs_g + input2[:, 0]
    yf = ys_g + input2[:, 1]
    x0, y0 = jnp.floor(xf), jnp.floor(yf)
    x_flat = input1.reshape(B, D, Hs * Ws)
    num = jnp.zeros((B, D, H, W), jnp.float32)
    den = jnp.zeros((B, 1, H, W), jnp.float32)
    for fy in range(kernel_size):
        for fx in range(kernel_size):
            xs = x0 + fx * dilation
            ys = y0 + fy * dilation
            w = jnp.exp(-((xs - xf) ** 2 + (ys - yf) ** 2) / (2.0 * sig * sig))
            xi = jnp.clip(xs, 0, Ws - 1).astype(jnp.int32)
            yi = jnp.clip(ys, 0, Hs - 1).astype(jnp.int32)
            idx = (yi * Ws + xi).reshape(B, 1, H * W)
            g = jnp.take_along_axis(
                x_flat, jnp.broadcast_to(idx, (B, D, H * W)), axis=2
            ).reshape(B, D, H, W)
            num = num + w[:, None] * g
            den = den + w[:, None]
    return num / den


if __name__ == "__main__":
    key = jax.random.PRNGKey(0)
    k1, k2 = jax.random.split(key)

    B, D, H, W = 2, 4, 16, 16
    input1 = jax.random.normal(k1, (B, D, H, W), dtype=jnp.float32)
    input2 = 3.0 * jax.random.normal(k2, (B, 2, H, W), dtype=jnp.float32)  # flow

    # tile_n=128 -> 2 spatial tiles per batch, exercising the tiled grid path.
    out = resample2d(input1, input2, kernel_size=2, dilation=1, sigma=5.0,
                     tile_n=128)
    out = jax.block_until_ready(out)

    ref = _reference(input1, input2, kernel_size=2, dilation=1, sigma=5.0)
    assert out.shape == (B, D, H, W)
    # bf16 MXU operands + approx reciprocal (per perf review) -> relaxed
    # tolerance vs. the pure-f32 reference; real bugs produce O(1) errors.
    assert jnp.allclose(out, ref, atol=5e-2, rtol=5e-2), float(
        jnp.max(jnp.abs(out - ref)))

    print("KERNEL_OK")
</pallas_src>

<mosaic_0001>
module attributes {stable_mosaic.version = 11 : i64} {
  func.func @_resample2d_kernel(%arg0: i32, %arg1: i32, %arg2: memref<1x4x256xf32, #tpu.memory_space<vmem>>, %arg3: memref<1x2x128xf32, #tpu.memory_space<vmem>>, %arg4: memref<1x4x128xf32, #tpu.memory_space<vmem>>) attributes {dimension_semantics = [#tpu.dimension_semantics<parallel>, #tpu.dimension_semantics<parallel>], iteration_bounds = array<i64: 2, 2>, scalar_prefetch = 0 : i64, scratch_operands = 0 : i64, tpu.core_type = #tpu.core_type<tc>, window_params = [{transform_indices = @transform_0, window_bounds = array<i64: 1, 4, 256>}, {transform_indices = @transform_1, window_bounds = array<i64: 1, 2, 128>}, {transform_indices = @transform_2, window_bounds = array<i64: 1, 4, 128>}]} {
    %c0 = arith.constant 0 : index
    %c0_0 = arith.constant 0 : index
    %c0_1 = arith.constant 0 : index
    %0 = vector.load %arg3[%c0, %c0_0, %c0_1] : memref<1x2x128xf32, #tpu.memory_space<vmem>>, vector<1x2x128xf32>
    %1 = vector.shape_cast %0 : vector<1x2x128xf32> to vector<2x128xf32>
    %2 = vector.extract_strided_slice %1 {offsets = [0, 0], sizes = [1, 128], strides = [1, 1]} : vector<2x128xf32> to vector<1x128xf32>
    %3 = vector.extract_strided_slice %1 {offsets = [1, 0], sizes = [1, 128], strides = [1, 1]} : vector<2x128xf32> to vector<1x128xf32>
    %c128_i32 = arith.constant 128 : i32
    %4 = arith.muli %arg1, %c128_i32 : i32
    %5 = tpu.iota {dimensions = array<i32: 1>} : vector<1x128xi32>
    %6 = vector.broadcast %4 : i32 to vector<1x128xi32>
    %7 = arith.addi %6, %5 : vector<1x128xi32>
    %8 = arith.sitofp %7 : vector<1x128xi32> to vector<1x128xf32>
    %cst = arith.constant 1.600000e+01 : f32
    %9 = vector.broadcast %cst : f32 to vector<1x128xf32>
    %10 = arith.divf %8, %9 : vector<1x128xf32>
    %11 = math.floor %10 : vector<1x128xf32>
    %cst_2 = arith.constant 1.600000e+01 : f32
    %12 = vector.broadcast %cst_2 : f32 to vector<1x128xf32>
    %13 = arith.mulf %11, %12 : vector<1x128xf32>
    %14 = arith.subf %8, %13 : vector<1x128xf32>
    %15 = arith.addf %14, %2 : vector<1x128xf32>
    %16 = arith.addf %11, %3 : vector<1x128xf32>
    %17 = math.floor %15 : vector<1x128xf32>
    %18 = math.floor %16 : vector<1x128xf32>
    %cst_3 = arith.constant 0.000000e+00 : f32
    %19 = vector.broadcast %cst_3 : f32 to vector<1x128xf32>
    %cst_4 = arith.constant 0.000000e+00 : f32
    %20 = vector.broadcast %cst_4 : f32 to vector<1x128xf32>
    %21 = arith.addf %18, %20 : vector<1x128xf32>
    %22 = arith.subf %21, %16 : vector<1x128xf32>
    %cst_5 = arith.constant 0.000000e+00 : f32
    %23 = vector.broadcast %cst_5 : f32 to vector<1x128xf32>
    %24 = arith.addf %17, %23 : vector<1x128xf32>
    %25 = arith.subf %24, %15 : vector<1x128xf32>
    %26 = arith.mulf %25, %25 : vector<1x128xf32>
    %27 = arith.mulf %22, %22 : vector<1x128xf32>
    %28 = arith.addf %26, %27 : vector<1x128xf32>
    %cst_6 = arith.constant -2.000000e-02 : f32
    %29 = vector.broadcast %cst_6 : f32 to vector<1x128xf32>
    %30 = arith.mulf %28, %29 : vector<1x128xf32>
    %31 = math.exp %30 : vector<1x128xf32>
    %32 = arith.addf %19, %31 : vector<1x128xf32>
    %cst_7 = arith.constant 1.000000e+00 : f32
    %33 = vector.broadcast %cst_7 : f32 to vector<1x128xf32>
    %34 = arith.addf %17, %33 : vector<1x128xf32>
    %35 = arith.subf %34, %15 : vector<1x128xf32>
    %36 = arith.mulf %35, %35 : vector<1x128xf32>
    %37 = arith.mulf %22, %22 : vector<1x128xf32>
    %38 = arith.addf %36, %37 : vector<1x128xf32>
    %cst_8 = arith.constant -2.000000e-02 : f32
    %39 = vector.broadcast %cst_8 : f32 to vector<1x128xf32>
    %40 = arith.mulf %38, %39 : vector<1x128xf32>
    %41 = math.exp %40 : vector<1x128xf32>
    %42 = arith.addf %32, %41 : vector<1x128xf32>
    %cst_9 = arith.constant 1.000000e+00 : f32
    %43 = vector.broadcast %cst_9 : f32 to vector<1x128xf32>
    %44 = arith.addf %18, %43 : vector<1x128xf32>
    %45 = arith.subf %44, %16 : vector<1x128xf32>
    %cst_10 = arith.constant 0.000000e+00 : f32
    %46 = vector.broadcast %cst_10 : f32 to vector<1x128xf32>
    %47 = arith.addf %17, %46 : vector<1x128xf32>
    %48 = arith.subf %47, %15 : vector<1x128xf32>
    %49 = arith.mulf %48, %48 : vector<1x128xf32>
    %50 = arith.mulf %45, %45 : vector<1x128xf32>
    %51 = arith.addf %49, %50 : vector<1x128xf32>
    %cst_11 = arith.constant -2.000000e-02 : f32
    %52 = vector.broadcast %cst_11 : f32 to vector<1x128xf32>
    %53 = arith.mulf %51, %52 : vector<1x128xf32>
    %54 = math.exp %53 : vector<1x128xf32>
    %55 = arith.addf %42, %54 : vector<1x128xf32>
    %cst_12 = arith.constant 1.000000e+00 : f32
    %56 = vector.broadcast %cst_12 : f32 to vector<1x128xf32>
    %57 = arith.addf %17, %56 : vector<1x128xf32>
    %58 = arith.subf %57, %15 : vector<1x128xf32>
    %59 = arith.mulf %58, %58 : vector<1x128xf32>
    %60 = arith.mulf %45, %45 : vector<1x128xf32>
    %61 = arith.addf %59, %60 : vector<1x128xf32>
    %cst_13 = arith.constant -2.000000e-02 : f32
    %62 = vector.broadcast %cst_13 : f32 to vector<1x128xf32>
    %63 = arith.mulf %61, %62 : vector<1x128xf32>
    %64 = math.exp %63 : vector<1x128xf32>
    %65 = arith.addf %55, %64 : vector<1x128xf32>
    %66 = tpu.reciprocal %65 {approx = true} : vector<1x128xf32> -> vector<1x128xf32>
    %cst_14 = arith.constant 0.000000e+00 : f32
    %67 = vector.broadcast %cst_14 : f32 to vector<1x128xf32>
    %68 = arith.addf %18, %67 : vector<1x128xf32>
    %cst_15 = arith.constant 0.000000e+00 : f32
    %cst_16 = arith.constant 1.500000e+01 : f32
    %69 = vector.broadcast %cst_15 : f32 to vector<1x128xf32>
    %70 = arith.maximumf %69, %68 : vector<1x128xf32>
    %71 = vector.broadcast %cst_16 : f32 to vector<1x128xf32>
    %72 = arith.minimumf %71, %70 : vector<1x128xf32>
    %73 = arith.fptosi %72 : vector<1x128xf32> to vector<1x128xi32>
    %cst_17 = arith.constant 1.000000e+00 : f32
    %74 = vector.broadcast %cst_17 : f32 to vector<1x128xf32>
    %75 = arith.addf %18, %74 : vector<1x128xf32>
    %cst_18 = arith.constant 0.000000e+00 : f32
    %cst_19 = arith.constant 1.500000e+01 : f32
    %76 = vector.broadcast %cst_18 : f32 to vector<1x128xf32>
    %77 = arith.maximumf %76, %75 : vector<1x128xf32>
    %78 = vector.broadcast %cst_19 : f32 to vector<1x128xf32>
    %79 = arith.minimumf %78, %77 : vector<1x128xf32>
    %80 = arith.fptosi %79 : vector<1x128xf32> to vector<1x128xi32>
    %cst_20 = arith.constant 0.000000e+00 : f32
    %81 = vector.broadcast %cst_20 : f32 to vector<1x128xf32>
    %82 = arith.addf %17, %81 : vector<1x128xf32>
    %cst_21 = arith.constant 0.000000e+00 : f32
    %cst_22 = arith.constant 1.500000e+01 : f32
    %83 = vector.broadcast %cst_21 : f32 to vector<1x128xf32>
    %84 = arith.maximumf %83, %82 : vector<1x128xf32>
    %85 = vector.broadcast %cst_22 : f32 to vector<1x128xf32>
    %86 = arith.minimumf %85, %84 : vector<1x128xf32>
    %87 = arith.fptosi %86 : vector<1x128xf32> to vector<1x128xi32>
    %cst_23 = arith.constant 1.000000e+00 : f32
    %88 = vector.broadcast %cst_23 : f32 to vector<1x128xf32>
    %89 = arith.addf %17, %88 : vector<1x128xf32>
    %cst_24 = arith.constant 0.000000e+00 : f32
    %cst_25 = arith.constant 1.500000e+01 : f32
    %90 = vector.broadcast %cst_24 : f32 to vector<1x128xf32>
    %91 = arith.maximumf %90, %89 : vector<1x128xf32>
    %92 = vector.broadcast %cst_25 : f32 to vector<1x128xf32>
    %93 = arith.minimumf %92, %91 : vector<1x128xf32>
    %94 = arith.fptosi %93 : vector<1x128xf32> to vector<1x128xi32>
    %95 = tpu.iota {dimensions = array<i32: 0>} : vector<16x128xi32>
    %96 = tpu.iota {dimensions = array<i32: 0>} : vector<16x128xi32>
    %97 = vector.broadcast %87 : vector<1x128xi32> to vector<16x128xi32>
    %98 = arith.cmpi eq, %96, %97 : vector<16x128xi32>
    %99 = arith.extui %98 : vector<16x128xi1> to vector<16x128xi32>
    %100 = arith.sitofp %99 : vector<16x128xi32> to vector<16x128xf32>
    %101 = vector.broadcast %94 : vector<1x128xi32> to vector<16x128xi32>
    %102 = arith.cmpi eq, %96, %101 : vector<16x128xi32>
    %103 = arith.extui %102 : vector<16x128xi1> to vector<16x128xi32>
    %104 = arith.sitofp %103 : vector<16x128xi32> to vector<16x128xf32>
    %cst_26 = arith.constant 0.000000e+00 : f32
    %105 = vector.broadcast %cst_26 : f32 to vector<16x16x128xf32>
    %106 = vector.broadcast %73 : vector<1x128xi32> to vector<16x128xi32>
    %107 = arith.cmpi eq, %95, %106 : vector<16x128xi32>
    %108 = arith.extui %107 : vector<16x128xi1> to vector<16x128xi32>
    %109 = arith.sitofp %108 : vector<16x128xi32> to vector<16x128xf32>
    %cst_27 = arith.constant 0.000000e+00 : f32
    %110 = vector.broadcast %cst_27 : f32 to vector<16x128xf32>
    %111 = arith.mulf %31, %66 : vector<1x128xf32>
    %112 = vector.broadcast %111 : vector<1x128xf32> to vector<16x128xf32>
    %113 = arith.mulf %112, %100 : vector<16x128xf32>
    %114 = arith.addf %110, %113 : vector<16x128xf32>
    %115 = arith.mulf %41, %66 : vector<1x128xf32>
    %116 = vector.broadcast %115 : vector<1x128xf32> to vector<16x128xf32>
    %117 = arith.mulf %116, %104 : vector<16x128xf32>
    %118 = arith.addf %114, %117 : vector<16x128xf32>
    %119 = vector.shape_cast %109 : vector<16x128xf32> to vector<16x1x128xf32>
    %120 = vector.shape_cast %118 : vector<16x128xf32> to vector<1x16x128xf32>
    %121 = vector.broadcast %119 : vector<16x1x128xf32> to vector<16x16x128xf32>
    %122 = vector.broadcast %120 : vector<1x16x128xf32> to vector<16x16x128xf32>
    %123 = arith.mulf %121, %122 : vector<16x16x128xf32>
    %124 = arith.addf %105, %123 : vector<16x16x128xf32>
    %125 = vector.broadcast %80 : vector<1x128xi32> to vector<16x128xi32>
    %126 = arith.cmpi eq, %95, %125 : vector<16x128xi32>
    %127 = arith.extui %126 : vector<16x128xi1> to vector<16x128xi32>
    %128 = arith.sitofp %127 : vector<16x128xi32> to vector<16x128xf32>
    %cst_28 = arith.constant 0.000000e+00 : f32
    %129 = vector.broadcast %cst_28 : f32 to vector<16x128xf32>
    %130 = arith.mulf %54, %66 : vector<1x128xf32>
    %131 = vector.broadcast %130 : vector<1x128xf32> to vector<16x128xf32>
    %132 = arith.mulf %131, %100 : vector<16x128xf32>
    %133 = arith.addf %129, %132 : vector<16x128xf32>
    %134 = arith.mulf %64, %66 : vector<1x128xf32>
    %135 = vector.broadcast %134 : vector<1x128xf32> to vector<16x128xf32>
    %136 = arith.mulf %135, %104 : vector<16x128xf32>
    %137 = arith.addf %133, %136 : vector<16x128xf32>
    %138 = vector.shape_cast %128 : vector<16x128xf32> to vector<16x1x128xf32>
    %139 = vector.shape_cast %137 : vector<16x128xf32> to vector<1x16x128xf32>
    %140 = vector.broadcast %138 : vector<16x1x128xf32> to vector<16x16x128xf32>
    %141 = vector.broadcast %139 : vector<1x16x128xf32> to vector<16x16x128xf32>
    %142 = arith.mulf %140, %141 : vector<16x16x128xf32>
    %143 = arith.addf %124, %142 : vector<16x16x128xf32>
    %144 = vector.shape_cast %143 : vector<16x16x128xf32> to vector<256x128xf32>
    %145 = arith.truncf %144 : vector<256x128xf32> to vector<256x128xbf16>
    %c0_29 = arith.constant 0 : index
    %c0_30 = arith.constant 0 : index
    %c0_31 = arith.constant 0 : index
    %146 = vector.load %arg2[%c0_29, %c0_30, %c0_31] : memref<1x4x256xf32, #tpu.memory_space<vmem>>, vector<1x4x256xf32>
    %147 = vector.shape_cast %146 : vector<1x4x256xf32> to vector<4x256xf32>
    %148 = arith.truncf %147 : vector<4x256xf32> to vector<4x256xbf16>
    %cst_32 = arith.constant dense<0.000000e+00> : vector<4x128xf32>
    %149 = tpu.matmul %148, %145, %cst_32 {dimension_numbers = #tpu.dot_dimension_numbers<[1], [0], [0], [1], [0, 0, 1, 1], [], []>} : vector<4x256xbf16>, vector<256x128xbf16>, vector<4x128xf32> -> vector<4x128xf32>
    %c0_33 = arith.constant 0 : index
    %c0_34 = arith.constant 0 : index
    %c0_35 = arith.constant 0 : index
    %150 = vector.load %arg4[%c0_33, %c0_34, %c0_35] : memref<1x4x128xf32, #tpu.memory_space<vmem>>, vector<1x4x128xf32>
    %151 = vector.shape_cast %150 : vector<1x4x128xf32> to vector<4x128xf32>
    %152 = vector.shape_cast %149 : vector<4x128xf32> to vector<1x4x128xf32>
    tpu.vector_store %arg4[%c0_33, %c0_34, %c0_35], %152 {strides = array<i32>} : memref<1x4x128xf32, #tpu.memory_space<vmem>>, vector<1x4x128xf32>,
    return
  }
  func.func @transform_0(%arg0: i32, %arg1: i32) -> (i32, i32, i32) {
    %c0_i32 = arith.constant 0 : i32
    %c0_i32_0 = arith.constant 0 : i32
    %c0_i32_1 = arith.constant 0 : i32
    return %arg0, %c0_i32, %c0_i32_0 : i32, i32, i32
  }
  func.func @transform_1(%arg0: i32, %arg1: i32) -> (i32, i32, i32) {
    %c0_i32 = arith.constant 0 : i32
    %c0_i32_0 = arith.constant 0 : i32
    return %arg0, %c0_i32, %arg1 : i32, i32, i32
  }
  func.func @transform_2(%arg0: i32, %arg1: i32) -> (i32, i32, i32) {
    %c0_i32 = arith.constant 0 : i32
    %c0_i32_0 = arith.constant 0 : i32
    return %arg0, %c0_i32, %arg1 : i32, i32, i32
  }
}

</mosaic_0001>

<llo_original>
// kernel: tpu_custom_call.1
$region0: #{tpu_custom_call.1}
  #allocation0 [shape = 'u32[]', space=smem, size = 0x4, offset = 0x4, fixed_abs, tag = 'smem constant byte address 0x4 - core index']
  #allocation1 [shape = 'u32[144,128]{1,0:T(1,128)}', space=vmem, size = 0x12000, scoped, tag = 'internal scratch']
  %s0 = inlined_call_operand.hbm [shape: f32[2,4,256], index: 0, kind: input, shape index: {}]
  %s1 = inlined_call_operand.hbm [shape: f32[2,2,256], index: 1, kind: input, shape index: {}]
  %s2 = inlined_call_operand.hbm [shape: f32[2,4,256], index: 2, kind: output, shape index: {}]
  %s3 = sld [smem:[#allocation0]]
  $region49: #{tpu_custom_call.1} parent=0
    _
  %s5 = ssub.s32 1, %s3
  %s6 = scalar_select 0, %s5, %s3
  $region1: #{tpu_custom_call.1} parent=0
    #allocation2 [shape = 'u8[8192]{0}', space=vmem, size = 0x2000, scoped, tag = 'input window, operand 0']
    #allocation3 [shape = 's32[2]{0}', space=sflag, size = 0x8, scoped, tag = 'scoped memory for tpu_custom_call.1']
    #allocation4 [shape = 's32[2]{0}', space=sflag, size = 0x8, scoped, tag = 'scoped memory for tpu_custom_call.1']
    #allocation5 [shape = 'u8[2048]{0}', space=vmem, size = 0x800, scoped, tag = 'input window, operand 1']
    #allocation6 [shape = 's32[2]{0}', space=sflag, size = 0x8, scoped, tag = 'scoped memory for tpu_custom_call.1']
    #allocation7 [shape = 'u8[4096]{0}', space=vmem, size = 0x1000, scoped, tag = 'output window, operand 0']
    %7 = vsyncpa [#allocation3], 0
    %s8 = scalar_lea.sflag [#allocation3], 1
    %9 = vsyncpa %s8, 0
    %10 = vsyncpa [#allocation6], 0
    %s11 = scalar_lea.sflag [#allocation6], 1
    %12 = vsyncpa %s11, 0
    %13 = vsyncpa [#allocation4], 0
    %s14 = scalar_lea.sflag [#allocation4], 1
    %15 = vsyncpa %s14, 0
    loop: start=0, step=1, limit=6
    $region2: #{tpu_custom_call.1} parent=1 // loop_pre_header
      _
    $region3: #{tpu_custom_call.1} parent=1 // loop_header
      %s17 = sphi 0, %s21
      %p18 = scmp.ge.s32.totalorder %s17, 6
      %s24 = sphi 0, %s36
      %s25 = sphi 0, %s32
      %s26 = sphi 0, %s24
      %s27 = sphi 0, %s25
      %s28 = sphi 0, %s26
      %s29 = sphi 0, %s27
      %s39 = sphi 0, %s41
      %s42 = sphi 0, %s39
      %s43 = sphi 0, %s42
      %s59 = sphi 0, %s43
      %s67 = sphi 0, %s69
      %s70 = sphi 0, %s67
      %s71 = sphi 0, %s70
      %s87 = sphi 0, %s71
      %s95 = sphi 0, %s97
      %s98 = sphi 0, %s95
      %s99 = sphi 0, %s98
      %s115 = sphi 0, %s99
    $region4: #{tpu_custom_call.1} parent=1 // loop_header_branch
      %20 = sbr.rel (%p18) target = $region8
    $region5: #{tpu_custom_call.1} parent=1 // loop_body
      %s22 = ssub.s32 %s17, 1
      %s23 = ssub.s32 %s17, 2
      %s30 = sadd.s32 1, %s25
      %p31 = scmp.ge.s32.totalorder %s30, 2
      %s32 = scalar_select %p31, 0, %s30
      %s33 = sadd.s32 1, %s24
      %s34 = scalar_select %p31, %s33, %s24
      %p35 = scmp.ge.s32.totalorder %s34, 2
      %s36 = scalar_select %p35, 0, %s34
      %s37 = ssub.s32 %s24, %s36
      %p38 = scmp.eq.s32.totalorder %s37, 0
      %s40 = sadd.s32 %s39, 1
      %s41 = scalar_select %p38, %s39, %s40
      %p44 = pneg %p38
      %p45 = scmp.eq.s32.totalorder %s17, 3
      %p46 = por %p44, %p45
      %p47 = scmp.ne.s32.totalorder %s39, %s42
      %p48 = scmp.eq.s32.totalorder %s17, 0
      %p49 = por %p47, %p48
      %p50 = scmp.ne.s32.totalorder %s39, %s42
      %p51 = scmp.eq.s32.totalorder %s22, 3
      %p52 = por %p50, %p51
      %p53 = scmp.ne.s32.totalorder %s42, %s43
      %p54 = scmp.eq.s32.totalorder %s22, 0
      %p55 = por %p53, %p54
      %p56 = scmp.ne.s32.totalorder %s42, %s43
      %p57 = scmp.eq.s32.totalorder %s23, 3
      %p58 = por %p56, %p57
      %p60 = scmp.ne.s32.totalorder %s43, %s59
      %p61 = scmp.eq.s32.totalorder %s23, 0
      %p62 = por %p60, %p61
      %s63 = ssub.s32 %s24, %s36
      %s64 = ssub.s32 %s25, %s32
      %s65 = sor.u32 %s63, %s64
      %p66 = scmp.eq.s32.totalorder %s65, 0
      %s68 = sadd.s32 %s67, 1
      %s69 = scalar_select %p66, %s67, %s68
      %p72 = pneg %p66
      %p73 = scmp.eq.s32.totalorder %s17, 3
      %p74 = por %p72, %p73
      %p75 = scmp.ne.s32.totalorder %s67, %s70
      %p76 = scmp.eq.s32.totalorder %s17, 0
      %p77 = por %p75, %p76
      %p78 = scmp.ne.s32.totalorder %s67, %s70
      %p79 = scmp.eq.s32.totalorder %s22, 3
      %p80 = por %p78, %p79
      %p81 = scmp.ne.s32.totalorder %s70, %s71
      %p82 = scmp.eq.s32.totalorder %s22, 0
      %p83 = por %p81, %p82
      %p84 = scmp.ne.s32.totalorder %s70, %s71
      %p85 = scmp.eq.s32.totalorder %s23, 3
      %p86 = por %p84, %p85
      %p88 = scmp.ne.s32.totalorder %s71, %s87
      %p89 = scmp.eq.s32.totalorder %s23, 0
      %p90 = por %p88, %p89
      %s91 = ssub.s32 %s24, %s36
      %s92 = ssub.s32 %s25, %s32
      %s93 = sor.u32 %s91, %s92
      %p94 = scmp.eq.s32.totalorder %s93, 0
      %s96 = sadd.s32 %s95, 1
      %s97 = scalar_select %p94, %s95, %s96
      %p100 = pneg %p94
      %p101 = scmp.eq.s32.totalorder %s17, 3
      %p102 = por %p100, %p101
      %p103 = scmp.ne.s32.totalorder %s95, %s98
      %p104 = scmp.eq.s32.totalorder %s17, 0
      %p105 = por %p103, %p104
      %p106 = scmp.ne.s32.totalorder %s95, %s98
      %p107 = scmp.eq.s32.totalorder %s22, 3
      %p108 = por %p106, %p107
      %p109 = scmp.ne.s32.totalorder %s98, %s99
      %p110 = scmp.eq.s32.totalorder %s22, 0
      %p111 = por %p109, %p110
      %p112 = scmp.ne.s32.totalorder %s98, %s99
      %p113 = scmp.eq.s32.totalorder %s23, 3
      %p114 = por %p112, %p113
      %p116 = scmp.ne.s32.totalorder %s99, %s115
      %p117 = scmp.eq.s32.totalorder %s23, 0
      %p118 = por %p116, %p117
      %p119 = scmp.le.s32.totalorder 1, %s17
      %p120 = scmp.lt.s32.totalorder %s17, 5
      %p121 = pnand %p119, %p120
      %p122 = pneg %p121
      // Predicated region
      $region9: #{tpu_custom_call.1} parent=5 // pred_check
        _
      $region10: #{tpu_custom_call.1} parent=5 // pred_check_branch
        %124 = sbr.rel (%p121) target = $region12
      $region11: #{tpu_custom_call.1} parent=5 // pred_region
        %s125 = ssub.s32 %s17, 1
      $region12: #{tpu_custom_call.1} parent=5 // pred_fallthru
        _
      %p126 = scmp.lt.s32.totalorder %s17, 4
      // Predicated region
      $region13: #{tpu_custom_call.1} parent=5 // pred_check
        %p127 = pneg %p126
      $region14: #{tpu_custom_call.1} parent=5 // pred_check_branch
        %129 = sbr.rel (%p127) target = $region16
      $region15: #{tpu_custom_call.1} parent=5 // pred_region
        // Predicated region
        $region17: #{tpu_custom_call.1} parent=15 // pred_check
          %p130 = pneg %p49
        $region18: #{tpu_custom_call.1} parent=15 // pred_check_branch
          %132 = sbr.rel (%p130) target = $region20
        $region19: #{tpu_custom_call.1} parent=15 // pred_region
          %s133 = sand.u32 %s39, 1
          %s134 = scalar_lea.sflag [#allocation3], %s133
          %s135 = sand.u32 %s39, 1
          %s136 = smul.addr %s135, 8
          %s137 = scalar_lea.vmem [#allocation2], %s136
          %s139 = ssub.s32 128, 128
          %140 = vsyncadd %s134, %s139
          %s141 = smul.addr %s24, 2
          %s142 = smul.addr %s141, 64
          %s143 = scalar_lea.hbm %s0, %s142
          %s145 = sshll.u32 %s137, 4
          %s146 = int_to_ptr.vmem [resolvable:$true] %s145
          %148 = dma.hbm_to_vmem [thread:$0]  %s143, 128, %s146, %s134
        $region20: #{tpu_custom_call.1} parent=15 // pred_fallthru
          _
        // Predicated region
        $region21: #{tpu_custom_call.1} parent=15 // pred_check
          %p149 = pneg %p77
        $region22: #{tpu_custom_call.1} parent=15 // pred_check_branch
          %151 = sbr.rel (%p149) target = $region24
        $region23: #{tpu_custom_call.1} parent=15 // pred_region
          %s152 = sand.u32 %s67, 1
          %s153 = scalar_lea.sflag [#allocation6], %s152
          %s154 = sand.u32 %s67, 1
          %s155 = smul.addr %s154, 2
          %s156 = scalar_lea.vmem [#allocation5], %s155
          %s158 = ssub.s32 32, 32
          %159 = vsyncadd %s153, %s158
          %s160 = smul.addr %s24, 2
          %s161 = sadd.s32 %s25, %s160
          %s162 = smul.addr %s161, 32
          %s163 = scalar_lea.hbm %s1, %s162
          %s165 = sshll.u32 %s156, 4
          %s166 = int_to_ptr.vmem [resolvable:$true] %s165
          %168 = dma.hbm_to_vmem [thread:$0]  %s163, 32, %s166, %s153
        $region24: #{tpu_custom_call.1} parent=15 // pred_fallthru
          _
      $region16: #{tpu_custom_call.1} parent=5 // pred_fallthru
        _
      %p169 = scmp.le.s32.totalorder 1, %s17
      %p170 = scmp.lt.s32.totalorder %s17, 5
      %p171 = pnand %p169, %p170
      %p172 = pneg %p171
      // Predicated region
      $region25: #{tpu_custom_call.1} parent=5 // pred_check
        _
      $region26: #{tpu_custom_call.1} parent=5 // pred_check_branch
        %174 = sbr.rel (%p171) target = $region28
      $region27: #{tpu_custom_call.1} parent=5 // pred_region
        %s175 = ssub.s32 %s17, 1
        %s176 = sand.u32 %s42, 1
        %s177 = scalar_lea.sflag [#allocation3], %s176
        %s178 = sand.u32 %s42, 1
        %s179 = smul.addr %s178, 8
        %s180 = scalar_lea.vmem [#allocation2], %s179
        // Predicated region
        $region29: #{tpu_custom_call.1} parent=27 // pred_check
          %p181 = pneg %p55
        $region30: #{tpu_custom_call.1} parent=27 // pred_check_branch
          %183 = sbr.rel (%p181) target = $region32
        $region31: #{tpu_custom_call.1} parent=27 // pred_region
          %184 = dma.done %s177, 128
        $region32: #{tpu_custom_call.1} parent=27 // pred_fallthru
          _
        %s185 = sand.u32 %s70, 1
        %s186 = scalar_lea.sflag [#allocation6], %s185
        %s187 = sand.u32 %s70, 1
        %s188 = smul.addr %s187, 2
        %s189 = scalar_lea.vmem [#allocation5], %s188
        // Predicated region
        $region33: #{tpu_custom_call.1} parent=27 // pred_check
          %p190 = pneg %p83
        $region34: #{tpu_custom_call.1} parent=27 // pred_check_branch
          %192 = sbr.rel (%p190) target = $region36
        $region35: #{tpu_custom_call.1} parent=27 // pred_region
          %193 = dma.done %s186, 32
        $region36: #{tpu_custom_call.1} parent=27 // pred_fallthru
          _
        %s194 = sand.u32 %s42, 1
        %s195 = scalar_lea.sflag [#allocation3], %s194
        %s196 = sand.u32 %s42, 1
        %s197 = smul.addr %s196, 8
        %s198 = scalar_lea.vmem [#allocation2], %s197
        %p199 = pneg %p55
        %p200 = pneg %p52
        %s201 = sand.u32 %s70, 1
        %s202 = scalar_lea.sflag [#allocation6], %s201
        %s203 = sand.u32 %s70, 1
        %s204 = smul.addr %s203, 2
        %s205 = scalar_lea.vmem [#allocation5], %s204
        %p206 = pneg %p83
        %p207 = pneg %p80
        %p208 = pneg %p111
        %p209 = pneg %p108
        %s210 = sand.u32 %s98, 1
        %s211 = scalar_lea.sflag [#allocation4], %s210
        %s212 = sand.u32 %s98, 1
        %s213 = smul.addr %s212, 4
        %s214 = scalar_lea.vmem [#allocation7], %s213
        %v216 = vld [vmem:[%s189] sm:$0x3]
        %s217 = smul.u32 %s27, 128
        %v218 = vlaneseq
        %v219 = vand.u32 %v218, 127
        %v220 = vstv %s217
        %v221 = vadd.s32 %v220, %v219
        %v222 = vcvt.s32.f32 %v221
        %v223 = vrcp.pop 16.0
        %v224 = vmul.f32 %v222, %v223
        %v225 = vfloor.f32 %v224
        %v226 = vmul.f32 %v225, 16.0
        %v227 = vsub.f32 %v222, %v226
        %v228 = vadd.f32 %v227, %v216
        %v229 = vadd.f32 %v225, %v216
        %v230 = vfloor.f32 %v228
        %v231 = vfloor.f32 %v229
        %v232 = vadd.f32 %v231, 0.0
        %v233 = vsub.f32 %v232, %v229
        %v234 = vadd.f32 %v230, 0.0
        %v235 = vsub.f32 %v234, %v228
        %v236 = vmul.f32 %v235, %v235
        %v237 = vmul.f32 %v233, %v233
        %v239 = vrot.slane %v237, 1
        %v241 = vadd.f32 %v236, %v239
        %v242 = vmul.f32 %v241, -0.02
        %v243 = vmul.f32 %v242, 1.442695
        %v244 = vpow.pop %v243
        %v245 = vadd.f32 %v244, 0.0
        %v246 = vadd.f32 %v230, 1.0
        %v247 = vsub.f32 %v246, %v228
        %v248 = vmul.f32 %v247, %v247
        %v249 = vadd.f32 %v248, %v239
        %v250 = vmul.f32 %v249, -0.02
        %v251 = vmul.f32 %v250, 1.442695
        %v252 = vpow.pop %v251
        %v253 = vadd.f32 %v245, %v252
        %v254 = vadd.f32 %v231, 1.0
        %v255 = vsub.f32 %v254, %v229
        %v256 = vmul.f32 %v255, %v255
        %v258 = vrot.slane %v256, 1
        %v260 = vadd.f32 %v236, %v258
        %v261 = vmul.f32 %v260, -0.02
        %v262 = vmul.f32 %v261, 1.442695
        %v263 = vpow.pop %v262
        %v264 = vadd.f32 %v253, %v263
        %v265 = vadd.f32 %v248, %v258
        %v266 = vmul.f32 %v265, -0.02
        %v267 = vmul.f32 %v266, 1.442695
        %v268 = vpow.pop %v267
        %v269 = vadd.f32 %v264, %v268
        %v270 = vrcp.pop %v269
        %v271 = vmax.f32 %v232, 0.0
        %v272 = vmin.f32 %v271, 15.0
        %v273 = vcvt.f32.s32.to.zero.pseudo %v272
        %v274 = vmax.f32 %v254, 0.0
        %v275 = vmin.f32 %v274, 15.0
        %v276 = vcvt.f32.s32.to.zero.pseudo %v275
        %v277 = vmax.f32 %v234, 0.0
        %v278 = vmin.f32 %v277, 15.0
        %v279 = vcvt.f32.s32.to.zero.pseudo %v278
        %v280 = vmax.f32 %v246, 0.0
        %v281 = vmin.f32 %v280, 15.0
        %v282 = vcvt.f32.s32.to.zero.pseudo %v281
        %v283 = vlaneseq
        %v284 = vshrl.u32 %v283, 7
        %v285 = vadd.s32 %v284, 8
        %v286 = vlaneseq
        %v287 = vshrl.u32 %v286, 7
        %v288 = vsub.s32 0, %v287
        %v289 = vrot.slane %v279, %v288
        %vm290 = vcmp.eq.s32.totalorder %v284, %v289
        %vm291 = vcmp.eq.s32.totalorder %v285, %v289
        %v292 = vsel %vm290, 1, 0
        %v293 = vsel %vm291, 1, 0
        %v294 = vcvt.s32.f32 %v292
        %v295 = vcvt.s32.f32 %v293
        %v296 = vlaneseq
        %v297 = vshrl.u32 %v296, 7
        %v298 = vsub.s32 0, %v297
        %v299 = vrot.slane %v282, %v298
        %vm300 = vcmp.eq.s32.totalorder %v284, %v299
        %vm301 = vcmp.eq.s32.totalorder %v285, %v299
        %v302 = vsel %vm300, 1, 0
        %v303 = vsel %vm301, 1, 0
        %v304 = vcvt.s32.f32 %v302
        %v305 = vcvt.s32.f32 %v303
        %v306 = vlaneseq
        %v307 = vshrl.u32 %v306, 7
        %v308 = vsub.s32 1, %v307
        %v309 = vrot.slane %v273, %v308
        %vm310 = vcmp.eq.s32.totalorder %v284, %v309
        %vm311 = vcmp.eq.s32.totalorder %v285, %v309
        %v312 = vsel %vm310, 1, 0
        %v313 = vsel %vm311, 1, 0
        %v314 = vcvt.s32.f32 %v312
        %v315 = vcvt.s32.f32 %v313
        %v316 = vmul.f32 %v244, %v270
        %v317 = vlaneseq
        %v318 = vshrl.u32 %v317, 7
        %v319 = vsub.s32 0, %v318
        %v320 = vrot.slane %v316, %v319
        %v321 = vmul.f32 %v320, %v294
        %v322 = vmul.f32 %v320, %v295
        %v323 = vadd.f32 %v321, 0.0
        %v324 = vadd.f32 %v322, 0.0
        %v325 = vmul.f32 %v252, %v270
        %v326 = vlaneseq
        %v327 = vshrl.u32 %v326, 7
        %v328 = vsub.s32 0, %v327
        %v329 = vrot.slane %v325, %v328
        %v330 = vmul.f32 %v329, %v304
        %v331 = vmul.f32 %v329, %v305
        %v332 = vadd.f32 %v323, %v330
        %v333 = vadd.f32 %v324, %v331
        %v336 = vcombine.high %v314, %v314
        %v338 = vunpack.c.l.s4 1966171168
        %v339 = vunpack.c.0.s8 %v338
        %v340 = vlaneseq
        %v341 = vshrl.u32 %v340, 7
        %v342 = vsub.s32 %v339, %v341
        %v343 = vrot.slane %v314, %v342
        %v345 = vunpack.c.l.s4 1966171168
        %v346 = vunpack.c.0.s8 %v345
        %v347 = vlaneseq
        %v348 = vshrl.u32 %v347, 7
        %v349 = vsub.s32 %v346, %v348
        %v350 = vrot.slane %v336, %v349
        %v351 = vcombine.high %v343, %v343
        %v352 = vcombine.high %v350, %v350
        %v354 = vunpack.c.l.s4 1966171168
        %v355 = vunpack.c.0.s8 %v354
        %v356 = vlaneseq
        %v357 = vshrl.u32 %v356, 7
        %v358 = vsub.s32 %v355, %v357
        %v359 = vrot.slane %v343, %v358
        %v361 = vunpack.c.l.s4 1966171168
        %v362 = vunpack.c.0.s8 %v361
        %v363 = vlaneseq
        %v364 = vshrl.u32 %v363, 7
        %v365 = vsub.s32 %v362, %v364
        %v366 = vrot.slane %v350, %v365
        %v368 = vunpack.c.l.s4 1966171168
        %v369 = vunpack.c.0.s8 %v368
        %v370 = vlaneseq
        %v371 = vshrl.u32 %v370, 7
        %v372 = vsub.s32 %v369, %v371
        %v373 = vrot.slane %v351, %v372
        %v375 = vunpack.c.l.s4 1966171168
        %v376 = vunpack.c.0.s8 %v375
        %v377 = vlaneseq
        %v378 = vshrl.u32 %v377, 7
        %v379 = vsub.s32 %v376, %v378
        %v380 = vrot.slane %v352, %v379
        %v381 = vcombine.high %v359, %v359
        %v382 = vcombine.high %v366, %v366
        %v383 = vcombine.high %v373, %v373
        %v384 = vcombine.high %v380, %v380
        %v385 = vcombine.high %v315, %v315
        %v387 = vunpack.c.l.s4 1966171168
        %v388 = vunpack.c.0.s8 %v387
        %v389 = vlaneseq
        %v390 = vshrl.u32 %v389, 7
        %v391 = vsub.s32 %v388, %v390
        %v392 = vrot.slane %v315, %v391
        %v394 = vunpack.c.l.s4 1966171168
        %v395 = vunpack.c.0.s8 %v394
        %v396 = vlaneseq
        %v397 = vshrl.u32 %v396, 7
        %v398 = vsub.s32 %v395, %v397
        %v399 = vrot.slane %v385, %v398
        %v400 = vcombine.high %v392, %v392
        %v401 = vcombine.high %v399, %v399
        %v403 = vunpack.c.l.s4 1966171168
        %v404 = vunpack.c.0.s8 %v403
        %v405 = vlaneseq
        %v406 = vshrl.u32 %v405, 7
        %v407 = vsub.s32 %v404, %v406
        %v408 = vrot.slane %v392, %v407
        %v410 = vunpack.c.l.s4 1966171168
        %v411 = vunpack.c.0.s8 %v410
        %v412 = vlaneseq
        %v413 = vshrl.u32 %v412, 7
        %v414 = vsub.s32 %v411, %v413
        %v415 = vrot.slane %v399, %v414
        %v417 = vunpack.c.l.s4 1966171168
        %v418 = vunpack.c.0.s8 %v417
        %v419 = vlaneseq
        %v420 = vshrl.u32 %v419, 7
        %v421 = vsub.s32 %v418, %v420
        %v422 = vrot.slane %v400, %v421
        %v424 = vunpack.c.l.s4 1966171168
        %v425 = vunpack.c.0.s8 %v424
        %v426 = vlaneseq
        %v427 = vshrl.u32 %v426, 7
        %v428 = vsub.s32 %v425, %v427
        %v429 = vrot.slane %v401, %v428
        %v430 = vcombine.high %v408, %v408
        %v431 = vcombine.high %v415, %v415
        %v432 = vcombine.high %v422, %v422
        %v433 = vcombine.high %v429, %v429
        %v434 = vlaneseq
        %v435 = vshrl.u32 %v434, 7
        %v436 = vsub.s32 0, %v435
        %v437 = vrot.slane %v359, %v436
        %v438 = vlaneseq
        %v439 = vshrl.u32 %v438, 7
        %v440 = vsub.s32 0, %v439
        %v441 = vrot.slane %v373, %v440
        %v442 = vlaneseq
        %v443 = vshrl.u32 %v442, 7
        %v444 = vsub.s32 0, %v443
        %v445 = vrot.slane %v381, %v444
        %v446 = vlaneseq
        %v447 = vshrl.u32 %v446, 7
        %v448 = vsub.s32 0, %v447
        %v449 = vrot.slane %v383, %v448
        %v450 = vlaneseq
        %v451 = vshrl.u32 %v450, 7
        %v452 = vsub.s32 0, %v451
        %v453 = vrot.slane %v366, %v452
        %v454 = vlaneseq
        %v455 = vshrl.u32 %v454, 7
        %v456 = vsub.s32 0, %v455
        %v457 = vrot.slane %v380, %v456
        %v458 = vlaneseq
        %v459 = vshrl.u32 %v458, 7
        %v460 = vsub.s32 0, %v459
        %v461 = vrot.slane %v382, %v460
        %v462 = vlaneseq
        %v463 = vshrl.u32 %v462, 7
        %v464 = vsub.s32 0, %v463
        %v465 = vrot.slane %v384, %v464
        %v466 = vlaneseq
        %v467 = vshrl.u32 %v466, 7
        %v468 = vsub.s32 0, %v467
        %v469 = vrot.slane %v408, %v468
        %v470 = vlaneseq
        %v471 = vshrl.u32 %v470, 7
        %v472 = vsub.s32 0, %v471
        %v473 = vrot.slane %v422, %v472
        %v474 = vlaneseq
        %v475 = vshrl.u32 %v474, 7
        %v476 = vsub.s32 0, %v475
        %v477 = vrot.slane %v430, %v476
        %v478 = vlaneseq
        %v479 = vshrl.u32 %v478, 7
        %v480 = vsub.s32 0, %v479
        %v481 = vrot.slane %v432, %v480
        %v482 = vlaneseq
        %v483 = vshrl.u32 %v482, 7
        %v484 = vsub.s32 0, %v483
        %v485 = vrot.slane %v415, %v484
        %v486 = vlaneseq
        %v487 = vshrl.u32 %v486, 7
        %v488 = vsub.s32 0, %v487
        %v489 = vrot.slane %v429, %v488
        %v490 = vlaneseq
        %v491 = vshrl.u32 %v490, 7
        %v492 = vsub.s32 0, %v491
        %v493 = vrot.slane %v431, %v492
        %v494 = vlaneseq
        %v495 = vshrl.u32 %v494, 7
        %v496 = vsub.s32 0, %v495
        %v497 = vrot.slane %v433, %v496
        %v514 = vmul.f32 %v437, %v332
        %v515 = vmul.f32 %v437, %v333
        %v516 = vmul.f32 %v441, %v332
        %v517 = vmul.f32 %v441, %v333
        %v518 = vmul.f32 %v445, %v332
        %v519 = vmul.f32 %v445, %v333
        %v520 = vmul.f32 %v449, %v332
        %v521 = vmul.f32 %v449, %v333
        %v522 = vmul.f32 %v453, %v332
        %v523 = vmul.f32 %v453, %v333
        %v524 = vmul.f32 %v457, %v332
        %v525 = vmul.f32 %v457, %v333
        %v526 = vmul.f32 %v461, %v332
        %v527 = vmul.f32 %v461, %v333
        %v528 = vmul.f32 %v465, %v332
        %v529 = vmul.f32 %v465, %v333
        %v530 = vmul.f32 %v469, %v332
        %v531 = vmul.f32 %v469, %v333
        %v532 = vmul.f32 %v473, %v332
        %v533 = vmul.f32 %v473, %v333
        %v534 = vmul.f32 %v477, %v332
        %v535 = vmul.f32 %v477, %v333
        %v536 = vmul.f32 %v481, %v332
        %v537 = vmul.f32 %v481, %v333
        %v538 = vmul.f32 %v485, %v332
        %v539 = vmul.f32 %v485, %v333
        %v540 = vmul.f32 %v489, %v332
        %v541 = vmul.f32 %v489, %v333
        %v542 = vmul.f32 %v493, %v332
        %v543 = vmul.f32 %v493, %v333
        %v544 = vmul.f32 %v497, %v332
        %v545 = vmul.f32 %v497, %v333
        %v546 = vadd.f32 %v514, 0.0
        %v547 = vadd.f32 %v515, 0.0
        %v548 = vadd.f32 %v516, 0.0
        %v549 = vadd.f32 %v517, 0.0
        %v550 = vadd.f32 %v518, 0.0
        %v551 = vadd.f32 %v519, 0.0
        %v552 = vadd.f32 %v520, 0.0
        %v553 = vadd.f32 %v521, 0.0
        %v554 = vadd.f32 %v522, 0.0
        %v555 = vadd.f32 %v523, 0.0
        %v556 = vadd.f32 %v524, 0.0
        %v557 = vadd.f32 %v525, 0.0
        %v558 = vadd.f32 %v526, 0.0
        %v559 = vadd.f32 %v527, 0.0
        %v560 = vadd.f32 %v528, 0.0
        %v561 = vadd.f32 %v529, 0.0
        %v562 = vadd.f32 %v530, 0.0
        %v563 = vadd.f32 %v531, 0.0
        %v564 = vadd.f32 %v532, 0.0
        %v565 = vadd.f32 %v533, 0.0
        %v566 = vadd.f32 %v534, 0.0
        %v567 = vadd.f32 %v535, 0.0
        %v568 = vadd.f32 %v536, 0.0
        %v569 = vadd.f32 %v537, 0.0
        %v570 = vadd.f32 %v538, 0.0
        %v571 = vadd.f32 %v539, 0.0
        %v572 = vadd.f32 %v540, 0.0
        %v573 = vadd.f32 %v541, 0.0
        %v574 = vadd.f32 %v542, 0.0
        %v575 = vadd.f32 %v543, 0.0
        %v576 = vadd.f32 %v544, 0.0
        %v577 = vadd.f32 %v545, 0.0
        %v578 = vlaneseq
        %v579 = vshrl.u32 %v578, 7
        %v580 = vsub.s32 1, %v579
        %v581 = vrot.slane %v276, %v580
        %vm582 = vcmp.eq.s32.totalorder %v284, %v581
        %vm583 = vcmp.eq.s32.totalorder %v285, %v581
        %v584 = vsel %vm582, 1, 0
        %v585 = vsel %vm583, 1, 0
        %v586 = vcvt.s32.f32 %v584
        %v587 = vcvt.s32.f32 %v585
        %v588 = vmul.f32 %v263, %v270
        %v589 = vlaneseq
        %v590 = vshrl.u32 %v589, 7
        %v591 = vsub.s32 0, %v590
        %v592 = vrot.slane %v588, %v591
        %v593 = vmul.f32 %v592, %v294
        %v594 = vmul.f32 %v592, %v295
        %v595 = vadd.f32 %v593, 0.0
        %v596 = vadd.f32 %v594, 0.0
        %v597 = vmul.f32 %v268, %v270
        %v598 = vlaneseq
        %v599 = vshrl.u32 %v598, 7
        %v600 = vsub.s32 0, %v599
        %v601 = vrot.slane %v597, %v600
        %v602 = vmul.f32 %v601, %v304
        %v603 = vmul.f32 %v601, %v305
        %v604 = vadd.f32 %v595, %v602
        %v605 = vadd.f32 %v596, %v603
        %v608 = vcombine.high %v586, %v586
        %v610 = vunpack.c.l.s4 1966171168
        %v611 = vunpack.c.0.s8 %v610
        %v612 = vlaneseq
        %v613 = vshrl.u32 %v612, 7
        %v614 = vsub.s32 %v611, %v613
        %v615 = vrot.slane %v586, %v614
        %v617 = vunpack.c.l.s4 1966171168
        %v618 = vunpack.c.0.s8 %v617
        %v619 = vlaneseq
        %v620 = vshrl.u32 %v619, 7
        %v621 = vsub.s32 %v618, %v620
        %v622 = vrot.slane %v608, %v621
        %v623 = vcombine.high %v615, %v615
        %v624 = vcombine.high %v622, %v622
        %v626 = vunpack.c.l.s4 1966171168
        %v627 = vunpack.c.0.s8 %v626
        %v628 = vlaneseq
        %v629 = vshrl.u32 %v628, 7
        %v630 = vsub.s32 %v627, %v629
        %v631 = vrot.slane %v615, %v630
        %v633 = vunpack.c.l.s4 1966171168
        %v634 = vunpack.c.0.s8 %v633
        %v635 = vlaneseq
        %v636 = vshrl.u32 %v635, 7
        %v637 = vsub.s32 %v634, %v636
        %v638 = vrot.slane %v622, %v637
        %v640 = vunpack.c.l.s4 1966171168
        %v641 = vunpack.c.0.s8 %v640
        %v642 = vlaneseq
        %v643 = vshrl.u32 %v642, 7
        %v644 = vsub.s32 %v641, %v643
        %v645 = vrot.slane %v623, %v644
        %v647 = vunpack.c.l.s4 1966171168
        %v648 = vunpack.c.0.s8 %v647
        %v649 = vlaneseq
        %v650 = vshrl.u32 %v649, 7
        %v651 = vsub.s32 %v648, %v650
        %v652 = vrot.slane %v624, %v651
        %v653 = vcombine.high %v631, %v631
        %v654 = vcombine.high %v638, %v638
        %v655 = vcombine.high %v645, %v645
        %v656 = vcombine.high %v652, %v652
        %v657 = vcombine.high %v587, %v587
        %v659 = vunpack.c.l.s4 1966171168
        %v660 = vunpack.c.0.s8 %v659
        %v661 = vlaneseq
        %v662 = vshrl.u32 %v661, 7
        %v663 = vsub.s32 %v660, %v662
        %v664 = vrot.slane %v587, %v663
        %v666 = vunpack.c.l.s4 1966171168
        %v667 = vunpack.c.0.s8 %v666
        %v668 = vlaneseq
        %v669 = vshrl.u32 %v668, 7
        %v670 = vsub.s32 %v667, %v669
        %v671 = vrot.slane %v657, %v670
        %v672 = vcombine.high %v664, %v664
        %v673 = vcombine.high %v671, %v671
        %v675 = vunpack.c.l.s4 1966171168
        %v676 = vunpack.c.0.s8 %v675
        %v677 = vlaneseq
        %v678 = vshrl.u32 %v677, 7
        %v679 = vsub.s32 %v676, %v678
        %v680 = vrot.slane %v664, %v679
        %v682 = vunpack.c.l.s4 1966171168
        %v683 = vunpack.c.0.s8 %v682
        %v684 = vlaneseq
        %v685 = vshrl.u32 %v684, 7
        %v686 = vsub.s32 %v683, %v685
        %v687 = vrot.slane %v671, %v686
        %v689 = vunpack.c.l.s4 1966171168
        %v690 = vunpack.c.0.s8 %v689
        %v691 = vlaneseq
        %v692 = vshrl.u32 %v691, 7
        %v693 = vsub.s32 %v690, %v692
        %v694 = vrot.slane %v672, %v693
        %v696 = vunpack.c.l.s4 1966171168
        %v697 = vunpack.c.0.s8 %v696
        %v698 = vlaneseq
        %v699 = vshrl.u32 %v698, 7
        %v700 = vsub.s32 %v697, %v699
        %v701 = vrot.slane %v673, %v700
        %v702 = vcombine.high %v680, %v680
        %v703 = vcombine.high %v687, %v687
        %v704 = vcombine.high %v694, %v694
        %v705 = vcombine.high %v701, %v701
        %v706 = vlaneseq
        %v707 = vshrl.u32 %v706, 7
        %v708 = vsub.s32 0, %v707
        %v709 = vrot.slane %v631, %v708
        %v710 = vlaneseq
        %v711 = vshrl.u32 %v710, 7
        %v712 = vsub.s32 0, %v711
        %v713 = vrot.slane %v645, %v712
        %v714 = vlaneseq
        %v715 = vshrl.u32 %v714, 7
        %v716 = vsub.s32 0, %v715
        %v717 = vrot.slane %v653, %v716
        %v718 = vlaneseq
        %v719 = vshrl.u32 %v718, 7
        %v720 = vsub.s32 0, %v719
        %v721 = vrot.slane %v655, %v720
        %v722 = vlaneseq
        %v723 = vshrl.u32 %v722, 7
        %v724 = vsub.s32 0, %v723
        %v725 = vrot.slane %v638, %v724
        %v726 = vlaneseq
        %v727 = vshrl.u32 %v726, 7
        %v728 = vsub.s32 0, %v727
        %v729 = vrot.slane %v652, %v728
        %v730 = vlaneseq
        %v731 = vshrl.u32 %v730, 7
        %v732 = vsub.s32 0, %v731
        %v733 = vrot.slane %v654, %v732
        %v734 = vlaneseq
        %v735 = vshrl.u32 %v734, 7
        %v736 = vsub.s32 0, %v735
        %v737 = vrot.slane %v656, %v736
        %v738 = vlaneseq
        %v739 = vshrl.u32 %v738, 7
        %v740 = vsub.s32 0, %v739
        %v741 = vrot.slane %v680, %v740
        %v742 = vlaneseq
        %v743 = vshrl.u32 %v742, 7
        %v744 = vsub.s32 0, %v743
        %v745 = vrot.slane %v694, %v744
        %v746 = vlaneseq
        %v747 = vshrl.u32 %v746, 7
        %v748 = vsub.s32 0, %v747
        %v749 = vrot.slane %v702, %v748
        %v750 = vlaneseq
        %v751 = vshrl.u32 %v750, 7
        %v752 = vsub.s32 0, %v751
        %v753 = vrot.slane %v704, %v752
        %v754 = vlaneseq
        %v755 = vshrl.u32 %v754, 7
        %v756 = vsub.s32 0, %v755
        %v757 = vrot.slane %v687, %v756
        %v758 = vlaneseq
        %v759 = vshrl.u32 %v758, 7
        %v760 = vsub.s32 0, %v759
        %v761 = vrot.slane %v701, %v760
        %v762 = vlaneseq
        %v763 = vshrl.u32 %v762, 7
        %v764 = vsub.s32 0, %v763
        %v765 = vrot.slane %v703, %v764
        %v766 = vlaneseq
        %v767 = vshrl.u32 %v766, 7
        %v768 = vsub.s32 0, %v767
        %v769 = vrot.slane %v705, %v768
        %v786 = vmul.f32 %v709, %v604
        %v787 = vmul.f32 %v709, %v605
        %v788 = vmul.f32 %v713, %v604
        %v789 = vmul.f32 %v713, %v605
        %v790 = vmul.f32 %v717, %v604
        %v791 = vmul.f32 %v717, %v605
        %v792 = vmul.f32 %v721, %v604
        %v793 = vmul.f32 %v721, %v605
        %v794 = vmul.f32 %v725, %v604
        %v795 = vmul.f32 %v725, %v605
        %v796 = vmul.f32 %v729, %v604
        %v797 = vmul.f32 %v729, %v605
        %v798 = vmul.f32 %v733, %v604
        %v799 = vmul.f32 %v733, %v605
        %v800 = vmul.f32 %v737, %v604
        %v801 = vmul.f32 %v737, %v605
        %v802 = vmul.f32 %v741, %v604
        %v803 = vmul.f32 %v741, %v605
        %v804 = vmul.f32 %v745, %v604
        %v805 = vmul.f32 %v745, %v605
        %v806 = vmul.f32 %v749, %v604
        %v807 = vmul.f32 %v749, %v605
        %v808 = vmul.f32 %v753, %v604
        %v809 = vmul.f32 %v753, %v605
        %v810 = vmul.f32 %v757, %v604
        %v811 = vmul.f32 %v757, %v605
        %v812 = vmul.f32 %v761, %v604
        %v813 = vmul.f32 %v761, %v605
        %v814 = vmul.f32 %v765, %v604
        %v815 = vmul.f32 %v765, %v605
        %v816 = vmul.f32 %v769, %v604
        %v817 = vmul.f32 %v769, %v605
        %v818 = vadd.f32 %v546, %v786
        %v819 = vadd.f32 %v547, %v787
        %v820 = vadd.f32 %v548, %v788
        %v821 = vadd.f32 %v549, %v789
        %v822 = vadd.f32 %v550, %v790
        %v823 = vadd.f32 %v551, %v791
        %v824 = vadd.f32 %v552, %v792
        %v825 = vadd.f32 %v553, %v793
        %v826 = vadd.f32 %v554, %v794
        %v827 = vadd.f32 %v555, %v795
        %v828 = vadd.f32 %v556, %v796
        %v829 = vadd.f32 %v557, %v797
        %v830 = vadd.f32 %v558, %v798
        %v831 = vadd.f32 %v559, %v799
        %v832 = vadd.f32 %v560, %v800
        %v833 = vadd.f32 %v561, %v801
        %v834 = vadd.f32 %v562, %v802
        %v835 = vadd.f32 %v563, %v803
        %v836 = vadd.f32 %v564, %v804
        %v837 = vadd.f32 %v565, %v805
        %v838 = vadd.f32 %v566, %v806
        %v839 = vadd.f32 %v567, %v807
        %v840 = vadd.f32 %v568, %v808
        %v841 = vadd.f32 %v569, %v809
        %v842 = vadd.f32 %v570, %v810
        %v843 = vadd.f32 %v571, %v811
        %v844 = vadd.f32 %v572, %v812
        %v845 = vadd.f32 %v573, %v813
        %v846 = vadd.f32 %v574, %v814
        %v847 = vadd.f32 %v575, %v815
        %v848 = vadd.f32 %v576, %v816
        %v849 = vadd.f32 %v577, %v817
        %v850 = vpack.c.bf16 %v819, %v818
        %v851 = vpack.c.bf16 %v821, %v820
        %v852 = vpack.c.bf16 %v823, %v822
        %v853 = vpack.c.bf16 %v825, %v824
        %v854 = vpack.c.bf16 %v827, %v826
        %v855 = vpack.c.bf16 %v829, %v828
        %v856 = vpack.c.bf16 %v831, %v830
        %v857 = vpack.c.bf16 %v833, %v832
        %v858 = vpack.c.bf16 %v835, %v834
        %v859 = vpack.c.bf16 %v837, %v836
        %v860 = vpack.c.bf16 %v839, %v838
        %v861 = vpack.c.bf16 %v841, %v840
        %v862 = vpack.c.bf16 %v843, %v842
        %v863 = vpack.c.bf16 %v845, %v844
        %v864 = vpack.c.bf16 %v847, %v846
        %v865 = vpack.c.bf16 %v849, %v848
        %v866 = vld [vmem:[%s180] sm:$0xff]
        %v868 = vcombine.high %v866, %v866
        %v870 = vpack.c.bf16 %v866, %v866
        %v871 = vpack.c.bf16 %v868, %v868
        %872 = vmatprep.subr.bf16.mxu0 0
        %873 = vmatpush1.bf16.msra.mxu0 %v850
        %874 = vmatprep.subr.bf16.mxu0 0
        %875 = vmatpush1.bf16.msra.mxu0 %v851
        %876 = vmatprep.subr.bf16.mxu0 0
        %877 = vmatpush1.bf16.msra.mxu0 %v852
        %878 = vmatprep.subr.bf16.mxu0 0
        %879 = vmatpush1.bf16.msra.mxu0 %v853
        %880 = vmatprep.subr.bf16.mxu0 0
        %881 = vmatpush1.bf16.msra.mxu0 %v854
        %882 = vmatprep.subr.bf16.mxu0 0
        %883 = vmatpush1.bf16.msra.mxu0 %v855
        %884 = vmatprep.subr.bf16.mxu0 0
        %885 = vmatpush1.bf16.msra.mxu0 %v856
        %886 = vmatprep.subr.bf16.mxu0 0
        %887 = vmatpush1.bf16.msra.mxu0 %v857
        %888 = vmatprep.subr.bf16.mxu0 0
        %889 = vmatpush1.bf16.msra.mxu0 %v858
        %890 = vmatprep.subr.bf16.mxu0 0
        %891 = vmatpush1.bf16.msra.mxu0 %v859
        %892 = vmatprep.subr.bf16.mxu0 0
        %893 = vmatpush1.bf16.msra.mxu0 %v860
        %894 = vmatprep.subr.bf16.mxu0 0
        %895 = vmatpush1.bf16.msra.mxu0 %v861
        %896 = vmatprep.subr.bf16.mxu0 0
        %897 = vmatpush1.bf16.msra.mxu0 %v862
        %898 = vmatprep.subr.bf16.mxu0 0
        %899 = vmatpush1.bf16.msra.mxu0 %v863
        %900 = vmatprep.subr.bf16.mxu0 0
        %901 = vmatpush1.bf16.msra.mxu0 %v864
        %902 = vmatprep.subr.bf16.mxu0 0
        %903 = vmatpush1.bf16.msra.mxu0 %v865
        %904 = vmatprep.mubr.bf16.mxu0 %v871
        %905 = vmatmul.mubr.bf16.gmra.mrb[0].mxu0 %v870
        %v906 = vpop.f32.mrb[0].mxu0
        %v907 = vadd.f32 0.0, %v906
        %v908 = vpop.f32.mrb[0].mxu0
        %v909 = vpop.f32.mrb[0].mxu0
        %v910 = vpop.f32.mrb[0].mxu0
        %911 = vdwg.mxu0
        %912 = vst [vmem:[%s214] sm:$0xf] %v907
        %s913 = sand.u32 %s98, 1
        %s914 = scalar_lea.sflag [#allocation4], %s913
        %s915 = sand.u32 %s98, 1
        %s916 = smul.addr %s915, 4
        %s917 = scalar_lea.vmem [#allocation7], %s916
        // Predicated region
        $region37: #{tpu_custom_call.1} parent=27 // pred_check
          %p918 = pneg %p108
        $region38: #{tpu_custom_call.1} parent=27 // pred_check_branch
          %920 = sbr.rel (%p918) target = $region40
        $region39: #{tpu_custom_call.1} parent=27 // pred_region
          %s922 = ssub.s32 64, 64
          %923 = vsyncadd %s914, %s922
          %s924 = smul.addr %s26, 2
          %s925 = sadd.s32 %s27, %s924
          %s926 = smul.addr %s925, 64
          %s927 = scalar_lea.hbm %s2, %s926
          %s929 = sshll.u32 %s917, 4
          %s930 = int_to_ptr.vmem [resolvable:$true] %s929
          %932 = dma.vmem_to_hbm [thread:$0]  %s930, 64, %s927, %s914
        $region40: #{tpu_custom_call.1} parent=27 // pred_fallthru
          _
      $region28: #{tpu_custom_call.1} parent=5 // pred_fallthru
        _
      %p933 = scmp.le.s32.totalorder 2, %s17
      // Predicated region
      $region41: #{tpu_custom_call.1} parent=5 // pred_check
        %p934 = pneg %p933
      $region42: #{tpu_custom_call.1} parent=5 // pred_check_branch
        %936 = sbr.rel (%p934) target = $region44
      $region43: #{tpu_custom_call.1} parent=5 // pred_region
        %s937 = ssub.s32 %s17, 2
        // Predicated region
        $region45: #{tpu_custom_call.1} parent=43 // pred_check
          %p938 = pneg %p114
        $region46: #{tpu_custom_call.1} parent=43 // pred_check_branch
          %940 = sbr.rel (%p938) target = $region48
        $region47: #{tpu_custom_call.1} parent=43 // pred_region
          %s941 = sand.u32 %s99, 1
          %s942 = scalar_lea.sflag [#allocation4], %s941
          %s943 = sand.u32 %s99, 1
          %s944 = smul.addr %s943, 4
          %s945 = scalar_lea.vmem [#allocation7], %s944
          %946 = dma.done %s942, 64
        $region48: #{tpu_custom_call.1} parent=43 // pred_fallthru
          _
      $region44: #{tpu_custom_call.1} parent=5 // pred_fallthru
        _
    $region6: #{tpu_custom_call.1} parent=1 // loop_footer
      %s21 = sadd.s32 1, %s17
    $region7: #{tpu_custom_call.1} parent=1 // loop_footer_branch
      %16 = sbr.rel target = $region3
    $region8: #{tpu_custom_call.1} parent=1 // loop_exit
      _
    %947 = vsyncpa [#allocation3], 1
    %s948 = scalar_lea.sflag [#allocation3], 1
    %949 = vsyncpa %s948, 1
    %950 = vsyncpa [#allocation6], 1
    %s951 = scalar_lea.sflag [#allocation6], 1
    %952 = vsyncpa %s951, 1
    %953 = vsyncpa [#allocation4], 1
    %s954 = scalar_lea.sflag [#allocation4], 1
    %955 = vsyncpa %s954, 1

</llo_original>
